<compile_context>
chip_gen: v5e
topology: v5e:2x2
jax: 0.10.0
libtpu: 0.0.40
codegen_flags: <defaults>
</compile_context>

<pallas_src>
import functools

import jax
import jax.numpy as jnp
from jax.experimental import pallas as pl
from jax.experimental.pallas import tpu as pltpu

_LANES = 128
_SUBLANES = 8


def _round_up(x, m):
    return ((x + m - 1) // m) * m


def _round_down(x, m):
    return (x // m) * m


def _logreg_dense_kernel(x_ref, w_ref, b_ref, o_ref):
    # x_ref: (bt, 128*F) — 128 samples per row, lane-dense.
    # w_ref: (128*F, 128) block-diagonal kron(I_128, w), resident in VMEM.
    # b_ref: (1,) f32 in SMEM.  o_ref: (bt, 128) lane-dense probabilities.
    z = jnp.dot(x_ref[...], w_ref[...], preferred_element_type=jnp.float32)
    o_ref[...] = jax.nn.sigmoid(z + b_ref[0]).astype(o_ref.dtype)


def _logreg_col_kernel(x_ref, w_ref, b_ref, o_ref):
    # Fallback: x_ref (tile, F), w_ref (1, F) resident, b_ref (1,) SMEM,
    # o_ref (tile, 1).  Exact f32 VPU multiply + XLU lane reduce.
    xw = x_ref[...].astype(jnp.float32) * w_ref[...].astype(jnp.float32)
    z = jnp.sum(xw, axis=-1, keepdims=True) + b_ref[0]
    o_ref[...] = jax.nn.sigmoid(z).astype(o_ref.dtype)


@functools.partial(jax.jit, static_argnames=("x_block_bytes",))
def logistic_regression(x, weight, bias, *, x_block_bytes=6 * 1024 * 1024):
    """x: [N, F]; weight: [1, F] (nn.Linear layout); bias: [1]. Returns [N, 1]."""
    n, f = x.shape
    dtype = x.dtype
    itemsize = jnp.dtype(dtype).itemsize
    w_row = weight.reshape(1, f).astype(dtype)
    b = bias.reshape(1).astype(jnp.float32)

    params = pltpu.CompilerParams(
        dimension_semantics=("parallel",),          # megacore sharding on v7x
        vmem_limit_bytes=48 * 1024 * 1024,          # past 16/32 MiB default, < v7x 64 MiB
    )

    # ---- Fast lane-dense path: N divisible by 128 and block-diag weight fits VMEM.
    wbd_bytes = _LANES * f * _LANES * itemsize
    if (n % _LANES == 0) and (wbd_bytes <= 8 * 1024 * 1024):
        rows = n // _LANES                          # slab rows: 128 samples each
        row_elems = _LANES * f
        x2 = x.reshape(rows, row_elems)             # free: row-major split of batch dim
        # Block-diagonal weight: wbd[s*F + i, t] = w[i] * (s == t)  -> x2 @ wbd == slab.
        eye = jnp.eye(_LANES, dtype=dtype)
        wbd = (eye[:, None, :] * w_row.reshape(f)[None, :, None]).reshape(row_elems, _LANES)

        bt_budget = max(_SUBLANES,
                        _round_down(x_block_bytes // (row_elems * itemsize), _SUBLANES))
        bt = rows if rows < _SUBLANES else min(bt_budget, _round_down(rows, _SUBLANES))

        out2 = pl.pallas_call(
            _logreg_dense_kernel,
            out_shape=jax.ShapeDtypeStruct((rows, _LANES), dtype),
            grid_spec=pltpu.PrefetchScalarGridSpec(
                num_scalar_prefetch=0,
                grid=(pl.cdiv(rows, bt),),
                in_specs=[
                    pl.BlockSpec((bt, row_elems), lambda i: (i, 0)),      # x: pipelined
                    pl.BlockSpec((row_elems, _LANES), lambda i: (0, 0)),  # weight: resident
                    pl.BlockSpec(memory_space=pltpu.MemorySpace.SMEM),    # bias scalar
                ],
                out_specs=pl.BlockSpec((bt, _LANES), lambda i: (i, 0)),   # lane-dense out
            ),
            compiler_params=params,
        )(x2, wbd, b)
        return out2.reshape(n, 1)                   # free: merge of leading dims

    # ---- Fallback path: ragged N or large F.  No full-array pad/cast; partial
    # trailing blocks are masked by Pallas (garbage rows are never stored).
    if n < _SUBLANES:
        x_in = jnp.pad(x, ((0, _SUBLANES - n), (0, 0)))   # tiny pad (< 8 rows) only
        n_rows = _SUBLANES
    else:
        x_in = x
        n_rows = n

    # Budget includes the lane-padded (tile, 1) output block (512 B per row in VMEM).
    bytes_per_row = f * itemsize + 512
    tile_budget = max(_SUBLANES, _round_down(x_block_bytes // bytes_per_row, _SUBLANES))
    tile = min(tile_budget, _round_down(n_rows, _SUBLANES))

    out = pl.pallas_call(
        _logreg_col_kernel,
        out_shape=jax.ShapeDtypeStruct((n_rows, 1), dtype),
        grid_spec=pltpu.PrefetchScalarGridSpec(
            num_scalar_prefetch=0,
            grid=(pl.cdiv(n_rows, tile),),
            in_specs=[
                pl.BlockSpec((tile, f), lambda i: (i, 0)),           # x: pipelined
                pl.BlockSpec((1, f), lambda i: (0, 0)),              # weight row: resident
                pl.BlockSpec(memory_space=pltpu.MemorySpace.SMEM),   # bias scalar
            ],
            out_specs=pl.BlockSpec((tile, 1), lambda i: (i, 0)),
        ),
        compiler_params=params,
    )(x_in, w_row, b)
    return out[:n]


if __name__ == "__main__":
    key = jax.random.PRNGKey(0)
    k_x, k_w, k_b = jax.random.split(key, 3)

    n_features = 32
    bound = float(n_features) ** -0.5  # nn.Linear init range U(-1/sqrt(F), 1/sqrt(F))
    weight = jax.random.uniform(k_w, (1, n_features), jnp.float32, -bound, bound)
    bias = jax.random.uniform(k_b, (1,), jnp.float32, -bound, bound)

    def ref_fn(xv):  # exact-f32 reference (elementwise mul + sum, no MXU)
        return jax.nn.sigmoid(jnp.sum(xv * weight, axis=-1, keepdims=True) + bias)

    # 1) Small batch (fallback path, single block).
    x_small = jax.random.normal(k_x, (8, n_features), dtype=jnp.float32)
    y_small = jax.block_until_ready(logistic_regression(x_small, weight, bias))
    assert y_small.shape == (8, 1)
    assert jnp.allclose(y_small, ref_fn(x_small), atol=1e-5), "mismatch (small batch)"

    # 2) 128-aligned batch -> lane-dense MXU path; small block budget forces a
    #    multi-step pipelined grid.  Loose tolerance: the MXU's default f32
    #    precision may round operands toward bf16.
    x_big = jax.random.normal(k_x, (2048, n_features), dtype=jnp.float32)
    y_big = jax.block_until_ready(
        logistic_regression(x_big, weight, bias, x_block_bytes=128 * 1024))
    assert y_big.shape == (2048, 1)
    assert jnp.allclose(y_big, ref_fn(x_big), atol=3e-3), "mismatch (lane-dense path)"

    # 3) Ragged batch -> fallback path with a masked partial trailing block.
    x_rag = jax.random.normal(k_x, (2050, n_features), dtype=jnp.float32)
    y_rag = jax.block_until_ready(
        logistic_regression(x_rag, weight, bias, x_block_bytes=512 * 1024))
    assert y_rag.shape == (2050, 1)
    assert jnp.allclose(y_rag, ref_fn(x_rag), atol=1e-5), "mismatch (ragged batch)"

    print("KERNEL_OK")
</pallas_src>

<mosaic_0001>
module attributes {stable_mosaic.version = 11 : i64} {
  func.func @_logreg_col_kernel(%arg0: i32, %arg1: memref<8x32xf32, #tpu.memory_space<vmem>>, %arg2: memref<1x32xf32, #tpu.memory_space<vmem>>, %arg3: memref<1xf32, #tpu.memory_space<smem>>, %arg4: memref<8x1xf32, #tpu.memory_space<vmem>>) attributes {dimension_semantics = [#tpu.dimension_semantics<parallel>], iteration_bounds = array<i64: 1>, scalar_prefetch = 0 : i64, scratch_operands = 0 : i64, tpu.core_type = #tpu.core_type<tc>, window_params = [{transform_indices = @transform_0, window_bounds = array<i64: 8, 32>}, {pipeline_mode = #tpu.pipeline_mode<synchronous>, transform_indices = @transform_1, window_bounds = array<i64: 1, 32>}, {transform_indices = @transform_2, window_bounds = array<i64: 1>}, {transform_indices = @transform_3, window_bounds = array<i64: 8, 1>}]} {
    %c0 = arith.constant 0 : index
    %c0_0 = arith.constant 0 : index
    %0 = vector.load %arg1[%c0, %c0_0] : memref<8x32xf32, #tpu.memory_space<vmem>>, vector<8x32xf32>
    %c0_1 = arith.constant 0 : index
    %c0_2 = arith.constant 0 : index
    %1 = vector.load %arg2[%c0_1, %c0_2] : memref<1x32xf32, #tpu.memory_space<vmem>>, vector<1x32xf32>
    %2 = vector.broadcast %1 : vector<1x32xf32> to vector<8x32xf32>
    %3 = arith.mulf %0, %2 : vector<8x32xf32>
    %cst = arith.constant dense<0.000000e+00> : vector<8xf32>
    %4 = vector.multi_reduction <add>, %3, %cst [1] : vector<8x32xf32> to vector<8xf32>
    %5 = vector.shape_cast %4 : vector<8xf32> to vector<8x1xf32>
    %c0_3 = arith.constant 0 : index
    %6 = memref.load %arg3[%c0_3] : memref<1xf32, #tpu.memory_space<smem>>
    %7 = vector.broadcast %6 : f32 to vector<8x1xf32>
    %8 = arith.addf %5, %7 : vector<8x1xf32>
    %9 = arith.negf %8 : vector<8x1xf32>
    %10 = math.exp %9 : vector<8x1xf32>
    %cst_4 = arith.constant 1.000000e+00 : f32
    %11 = vector.broadcast %cst_4 : f32 to vector<8x1xf32>
    %12 = arith.addf %11, %10 : vector<8x1xf32>
    %13 = arith.divf %11, %12 : vector<8x1xf32>
    %c0_5 = arith.constant 0 : index
    %c0_6 = arith.constant 0 : index
    %14 = vector.load %arg4[%c0_5, %c0_6] : memref<8x1xf32, #tpu.memory_space<vmem>>, vector<8x1xf32>
    tpu.vector_store %arg4[%c0_5, %c0_6], %13 {strides = array<i32>} : memref<8x1xf32, #tpu.memory_space<vmem>>, vector<8x1xf32>,
    return
  }
  func.func @transform_0(%arg0: i32) -> (i32, i32) {
    %c0_i32 = arith.constant 0 : i32
    %c0_i32_0 = arith.constant 0 : i32
    return %arg0, %c0_i32 : i32, i32
  }
  func.func @transform_1(%arg0: i32) -> (i32, i32) {
    %c0_i32 = arith.constant 0 : i32
    %c0_i32_0 = arith.constant 0 : i32
    %c0_i32_1 = arith.constant 0 : i32
    return %c0_i32, %c0_i32_0 : i32, i32
  }
  func.func @transform_2(%arg0: i32) -> i32 {
    %c0_i32 = arith.constant 0 : i32
    %c0_i32_0 = arith.constant 0 : i32
    return %c0_i32 : i32
  }
  func.func @transform_3(%arg0: i32) -> (i32, i32) {
    %c0_i32 = arith.constant 0 : i32
    %c0_i32_0 = arith.constant 0 : i32
    return %arg0, %c0_i32 : i32, i32
  }
}

</mosaic_0001>

<llo_original>
// kernel: logistic_regression.1
$region0: #{logistic_regression.1}
  #allocation0 [shape = 'u32[]', space=smem, size = 0x4, offset = 0x4, fixed_abs, tag = 'smem constant byte address 0x4 - core index']
  #allocation1 [shape = 'u32[72,128]{1,0:T(1,128)}', space=vmem, size = 0x9000, scoped, tag = 'internal scratch']
  #allocation2 [shape = 'f32[1]{0:T(128)S(6)}', space=smem, size = 0x200, scoped, tag = 'scoped memory for logistic_regression.1']
  %s0 = inlined_call_operand.hbm [shape: f32[8,32], index: 0, kind: input, shape index: {}]
  %s1 = inlined_call_operand.vmem [shape: f32[1,32], index: 1, kind: input, shape index: {}]
  %s2 = inlined_call_operand.<no memory space> [shape: f32[1], index: 2, kind: input, shape index: {}]
  %s3 = inlined_call_operand.vmem [shape: f32[8,1], index: 3, kind: output, shape index: {}]
  %s4 = sld [smem:[#allocation0]]
  $region26: #{logistic_regression.1} parent=0
    _
  %s6 = ssub.s32 1, %s4
  %s7 = scalar_select 0, %s6, %s4
  %8 = sst [smem:[#allocation2]] %s2
  $region1: #{logistic_regression.1} parent=0
    #allocation3 [shape = 'u8[4096]{0}', space=vmem, size = 0x1000, scoped, tag = 'input window, operand 0, single buffered']
    #allocation4 [shape = 's32[1]{0}', space=sflag, size = 0x4, scoped, tag = 'scoped memory for logistic_regression.1']
    %9 = vsyncpa [#allocation4], 0
    // Predicated region
    $region2: #{logistic_regression.1} parent=1 // pred_check
      _
    $region3: #{logistic_regression.1} parent=1 // pred_check_branch
      %11 = sbr.rel (0) target = $region5
    $region4: #{logistic_regression.1} parent=1 // pred_region
      %13 = vsyncadd [#allocation4], 0
      %s15 = sshll.u32 %s0, 4
      %s16 = int_to_ptr.hbm [resolvable:$true] %s15
      %s17 = sshll.u32 [#allocation3], 4
      %s18 = int_to_ptr.vmem [resolvable:$true] %s17
      %20 = dma.hbm_to_vmem [thread:$0]  %s16, 128, %s18, [#allocation4]
    $region5: #{logistic_regression.1} parent=1 // pred_fallthru
      _
    // Predicated region
    $region6: #{logistic_regression.1} parent=1 // pred_check
      _
    $region7: #{logistic_regression.1} parent=1 // pred_check_branch
      %22 = sbr.rel (0) target = $region9
    $region8: #{logistic_regression.1} parent=1 // pred_region
      _
    $region9: #{logistic_regression.1} parent=1 // pred_fallthru
      _
    // Predicated region
    $region10: #{logistic_regression.1} parent=1 // pred_check
      _
    $region11: #{logistic_regression.1} parent=1 // pred_check_branch
      %24 = sbr.rel (0) target = $region13
    $region12: #{logistic_regression.1} parent=1 // pred_region
      _
    $region13: #{logistic_regression.1} parent=1 // pred_fallthru
      _
    // Predicated region
    $region14: #{logistic_regression.1} parent=1 // pred_check
      _
    $region15: #{logistic_regression.1} parent=1 // pred_check_branch
      %26 = sbr.rel (0) target = $region17
    $region16: #{logistic_regression.1} parent=1 // pred_region
      %28 = dma.done [#allocation4], 128
    $region17: #{logistic_regression.1} parent=1 // pred_fallthru
      _
    %v29 = vld [vmem:[#allocation3] sm:$0xff]
    %v30 = vld [vmem:[%s1] sm:$0x1]
    %v32 = vperm.slane %v30, 0
    %v34 = vmul.f32 %v29, %v32
    %vm35 = vcmask 261120
    %v36 = vsel %vm35, %v34, 0.0
    %37 = vadd.xlane.f32.xlu0 %v36
    %v38 = vpop.xlane.xlu0 %37
    %s39 = sld [smem:[#allocation2]]
    %v40 = vstv %s39
    %v41 = vadd.f32 %v38, %v40
    %v42 = vxor.u32 %v41, 2147483648
    %v43 = vmul.f32 %v42, 1.442695
    %v44 = vpow.pop %v43
    %v45 = vadd.f32 %v44, 1.0
    %v46 = vrcp.pop %v45
    %v47 = vmul.f32 %v45, %v46
    %v48 = vsub.f32 1.0, %v47
    %v49 = vmul.f32 %v46, %v48
    %v50 = vadd.f32 %v46, %v49
    %vm51 = vweird.f32 %v45
    %vm52 = vweird.f32 %v46
    %vm53 = vmor %vm51, %vm52
    %v54 = vsel %vm53, %v46, %v50
    %v55 = vand.u32 2147483647, %v45
    %vm56 = vcmp.eq.f32.partialorder %v55, 8.507059e+37
    %v57 = vand.u32 %v45, 2147483648
    %v58 = vor.u32 1.1754944e-38, %v57
    %v59 = vsel %vm56, %v58, %v54
    %v60 = vmul.f32 1.0, %v59
    %vm61 = vcmask 7168
    %62 = vst.msk [vmem:[%s3] sm:$0xff] %vm61, %v60
    // Predicated region
    $region18: #{logistic_regression.1} parent=1 // pred_check
      _
    $region19: #{logistic_regression.1} parent=1 // pred_check_branch
      %64 = sbr.rel (0) target = $region21
    $region20: #{logistic_regression.1} parent=1 // pred_region
      _
    $region21: #{logistic_regression.1} parent=1 // pred_fallthru
      _
    // Predicated region
    $region22: #{logistic_regression.1} parent=1 // pred_check
      _
    $region23: #{logistic_regression.1} parent=1 // pred_check_branch
      %66 = sbr.rel (0) target = $region25
    $region24: #{logistic_regression.1} parent=1 // pred_region
      _
    $region25: #{logistic_regression.1} parent=1 // pred_fallthru
      _
    %67 = vsyncpa [#allocation4], 1

</llo_original>
